<compile_context>
chip_gen: v7x
topology: tpu7x:2x2x1
jax: 0.10.0
libtpu: 0.0.40
codegen_flags: <defaults>
</compile_context>

<pallas_src>
import jax
import jax.numpy as jnp
from jax import lax
from jax.experimental import pallas as pl
from jax.experimental.pallas import tpu as pltpu


def _pick_tile(n, candidates):
    for t in candidates:
        if n % t == 0:
            return t
    return n


def _pick_lane_tile(L, c):
    # Largest lane tile (multiple of 128, divisor of L) whose (c, tile) f32 slab
    # stays well under the scoped-VMEM double-buffer budget.
    for t in (4096, 2048, 1024, 512, 256, 128):
        if L % t == 0 and c * t * 4 <= 512 * 1024:
            return t
    # TODO(synk): pad L up to a 128 multiple for awkward spatial sizes instead of
    # falling back to one full-width block.
    return 128 if L % 128 == 0 else L


# --------------------------------------------------------------------------
# Kernel A: dis_priority multiply + score MLP (sigmoid) + LayerNorm, fused,
#           operating channels-first on native NCHW input.
# --------------------------------------------------------------------------
def _score_norm_kernel(src_ref, dis_ref, w1_ref, b1_ref, w2_ref, b2_ref,
                       weight_ref, normed_ref):
    s = src_ref[0]                                  # (c, tile) raw features, channels-first
    x = s * dis_ref[0]                              # fused dis_priority weighting (sublane bcast)

    # score_pred_net: Conv2d(c, c, 1) -> ReLU -> Conv2d(c, 1, 1) -> sigmoid
    h1 = jnp.dot(w1_ref[...], x, preferred_element_type=jnp.float32) + b1_ref[...]
    h1 = jnp.maximum(h1, 0.0)                       # (c, tile)
    # Second conv has a single output channel: VPU multiply + sublane reduction
    # (XLU) instead of a degenerate 1-output MXU matmul.
    logit = jnp.sum(h1 * w2_ref[...], axis=0, keepdims=True) + b2_ref[...]   # (1, tile)
    weight_ref[0] = jax.nn.sigmoid(logit)           # lane-dense score output

    # nn.LayerNorm(input_dim, elementwise_affine=False), eps=1e-5, on the *raw*
    # (un-weighted) features, exactly as the reference module does.
    mean = jnp.mean(s, axis=0, keepdims=True)
    var = jnp.mean(jnp.square(s - mean), axis=0, keepdims=True)
    normed = (s - mean) * lax.rsqrt(var + 1e-5)     # (c, tile)
    normed_ref[...] = normed.T                      # single in-kernel transpose -> (tile, c)


def _score_and_norm(src_r, dis_r, w1, b1, w2, b2):
    bs, c, L = src_r.shape
    tile = _pick_lane_tile(L, c)
    nblk = L // tile
    return pl.pallas_call(
        _score_norm_kernel,
        out_shape=(jax.ShapeDtypeStruct((bs, 1, L), jnp.float32),
                   jax.ShapeDtypeStruct((bs * L, c), jnp.float32)),
        grid_spec=pltpu.PrefetchScalarGridSpec(
            num_scalar_prefetch=0,
            grid=(bs, nblk),
            in_specs=[
                pl.BlockSpec((1, c, tile), lambda b, i: (b, 0, i)),   # src (NCHW row-flat)
                pl.BlockSpec((1, 1, tile), lambda b, i: (b, 0, i)),   # dis_priority
                pl.BlockSpec((c, c), lambda b, i: (0, 0)),            # W1 (out, in)
                pl.BlockSpec((c, 1), lambda b, i: (0, 0)),            # b1
                pl.BlockSpec((c, 1), lambda b, i: (0, 0)),            # W2 (per-channel)
                pl.BlockSpec((1, 1), lambda b, i: (0, 0)),            # b2
            ],
            out_specs=[
                pl.BlockSpec((1, 1, tile), lambda b, i: (b, 0, i)),                 # weights
                pl.BlockSpec((tile, c), lambda b, i, _n=nblk: (b * _n + i, 0)),     # normed rows
            ],
        ),
        compiler_params=pltpu.CompilerParams(
            dimension_semantics=("parallel", "parallel")),
    )(src_r, dis_r, w1, b1, w2, b2)


# --------------------------------------------------------------------------
# Kernel B: gather the top-k normalized rows with per-row DMAs from HBM, scale
#           each row by its sample weight (fused into the single output write),
#           and write the result directly as (K, bs, c).
# --------------------------------------------------------------------------
def _make_gather_scale_kernel(bs, ktile, num_k):
    def kernel(idx_ref, normed_hbm, w_ref, out_ref, buf, sems):
        kt = pl.program_id(0)
        copies = []
        for b in range(bs):                 # static, tiny -- fully unrolled
            for j in range(ktile):          # static -- DMAs issued back-to-back
                idx = idx_ref[b * num_k + kt * ktile + j]    # flat row index (SMEM)
                cp = pltpu.make_async_copy(normed_hbm.at[idx],   # (c,) row in HBM
                                           buf.at[j, b],         # (c,) row in VMEM
                                           sems.at[j, b])
                cp.start()
                copies.append(cp)
        for cp in copies:
            cp.wait()
        # Fused sample-weight scaling; (ktile, bs, c) written once.
        out_ref[...] = buf[...] * w_ref[...]
    return kernel


def _gather_and_scale(topk_flat_1d, w_kbs, normed_flat, bs):
    _, c = normed_flat.shape
    num_k = w_kbs.shape[0]
    ktile = _pick_tile(num_k, (32, 16, 8, 4, 2, 1))
    grid = (num_k // ktile,)
    kernel = _make_gather_scale_kernel(bs, ktile, num_k)
    return pl.pallas_call(
        kernel,
        out_shape=jax.ShapeDtypeStruct((num_k, bs, c), jnp.float32),
        grid_spec=pltpu.PrefetchScalarGridSpec(
            num_scalar_prefetch=1,                       # flat top-k indices -> SMEM
            grid=grid,
            in_specs=[
                pl.BlockSpec(memory_space=pl.ANY),       # normed stays in HBM
                pl.BlockSpec((ktile, bs, 1), lambda kt, idx: (kt, 0, 0)),
            ],
            out_specs=pl.BlockSpec((ktile, bs, c), lambda kt, idx: (kt, 0, 0)),
            scratch_shapes=[
                pltpu.VMEM((ktile, bs, c), jnp.float32),
                pltpu.SemaphoreType.DMA((ktile, bs)),
            ],
        ),
        compiler_params=pltpu.CompilerParams(
            dimension_semantics=("arbitrary",)),
    )(topk_flat_1d, normed_flat, w_kbs)


# --------------------------------------------------------------------------
# Module wrapper (glue in plain JAX).
# --------------------------------------------------------------------------
def init_sort_sampler_params(key, input_dim):
    # Matches nn.Conv2d(input_dim, input_dim, 1) and nn.Conv2d(input_dim, 1, 1),
    # stored channels-first: W1 is (out, in), W2 / b1 are per-channel columns.
    k1, k2, k3, k4 = jax.random.split(key, 4)
    s = 1.0 / jnp.sqrt(jnp.float32(input_dim))
    w1 = jax.random.uniform(k1, (input_dim, input_dim), jnp.float32, -s, s)
    b1 = jax.random.uniform(k2, (input_dim, 1), jnp.float32, -s, s)
    w2 = jax.random.uniform(k3, (input_dim, 1), jnp.float32, -s, s)
    b2 = jax.random.uniform(k4, (1, 1), jnp.float32, -s, s)
    # Note: self.v_proj is defined in __init__ but never used in forward().
    return (w1, b1, w2, b2)


def sort_sampler_forward(src, pos_embed, dis_priority, params,
                         sample_ratio=None, topk_ratio=0.5):
    """src: (bs, c, h, w) NCHW; pos_embed: (h*w, bs, c); dis_priority: (bs, h, w)."""
    w1, b1, w2, b2 = params
    bs, c, h, w = src.shape
    L = h * w
    if sample_ratio is None:
        sample_ratio = topk_ratio
    # sample_lens are all equal -> max == min == int(h*w*ratio) (torch .int() truncation)
    K = int(L * sample_ratio)

    # Free reshapes only -- the NCHW->row-major-channels-last change of layout is
    # done inside Kernel A (no extra HBM round trip for src).
    src_r = src.reshape(bs, c, L).astype(jnp.float32)
    dis_r = dis_priority.reshape(bs, 1, L).astype(jnp.float32)

    weight_b1L, normed_flat = _score_and_norm(src_r, dis_r, w1, b1, w2, b2)
    sample_weight = weight_b1L.reshape(bs, L)

    # TODO(synk): descending sort (torch.sort) has no clean Pallas TPU primitive;
    # the argsort runs in XLA, gathers/compute stay in Pallas.
    sort_order = jnp.argsort(-sample_weight, axis=1).astype(jnp.int32)
    sort_confidence_topk = sort_order[:, :K]                           # (bs, K)

    w_topk = jnp.take_along_axis(sample_weight, sort_confidence_topk, axis=1)  # (bs, K)
    sample_reg_loss = jnp.mean(w_topk)

    # Gather inputs: flattened row indices (b*L + topk) and the per-sample weight
    # already in the (K, bs, 1) output layout so Kernel B writes (K, bs, c) directly.
    topk_flat = (sort_confidence_topk
                 + (jnp.arange(bs, dtype=jnp.int32) * L)[:, None]).reshape(-1)
    w_kbs = jnp.transpose(w_topk, (1, 0))[..., None].astype(jnp.float32)

    src_sampled = _gather_and_scale(topk_flat, w_kbs, normed_flat, bs)  # (K, bs, c)

    # torch.gather on pos_embed uses an index whose last dim is 1 -> channel 0 only
    # (faithful to the reference module's behavior).
    pos_embed_sampled = pos_embed[sort_confidence_topk.T,
                                  jnp.arange(bs)[None, :], 0][..., None]   # (K, bs, 1)

    return src_sampled, sample_reg_loss, sort_confidence_topk, pos_embed_sampled


# --------------------------------------------------------------------------
# Pure-JAX reference (light correctness check of the kernels).
# --------------------------------------------------------------------------
def _reference_weight_and_norm(src, dis_priority, params):
    w1, b1, w2, b2 = params
    bs, c, h, w = src.shape
    L = h * w
    src_lc = jnp.transpose(src.reshape(bs, c, L), (0, 2, 1)).astype(jnp.float32)
    src_dis = src_lc * dis_priority.reshape(bs, L, 1).astype(jnp.float32)
    h1 = jnp.maximum(
        jnp.einsum('blc,oc->blo', src_dis, w1, precision='highest') + b1[:, 0], 0.0)
    logit = jnp.einsum('blo,o->bl', h1, w2[:, 0], precision='highest') + b2[0, 0]
    weight = jax.nn.sigmoid(logit)                                      # (bs, L)
    mean = src_lc.mean(-1, keepdims=True)
    var = ((src_lc - mean) ** 2).mean(-1, keepdims=True)
    normed = (src_lc - mean) / jnp.sqrt(var + 1e-5)
    return weight, normed


if __name__ == "__main__":
    bs, c, h, w = 2, 32, 16, 16
    L = h * w
    sample_ratio = 0.25
    key = jax.random.PRNGKey(0)
    kp_params, kx, kpos, kdis = jax.random.split(key, 4)

    params = init_sort_sampler_params(kp_params, c)
    src = jax.random.normal(kx, (bs, c, h, w), jnp.float32)
    pos_embed = jax.random.normal(kpos, (L, bs, c), jnp.float32)
    dis_priority = jax.random.uniform(kdis, (bs, h, w), jnp.float32,
                                      minval=0.5, maxval=1.5)

    outs = sort_sampler_forward(src, pos_embed, dis_priority, params,
                                sample_ratio=sample_ratio, topk_ratio=0.5)
    src_sampled, sample_reg_loss, topk, pos_embed_sampled = jax.block_until_ready(outs)

    K = int(L * sample_ratio)
    assert src_sampled.shape == (K, bs, c)
    assert topk.shape == (bs, K)
    assert pos_embed_sampled.shape == (K, bs, 1)
    assert sample_reg_loss.shape == ()

    # Light numeric check against the pure-JAX reference (kernel topk reused so
    # the check is insensitive to tie ordering).
    ref_w, ref_n = _reference_weight_and_norm(src, dis_priority, params)
    ref_w_topk = jnp.take_along_axis(ref_w, topk, axis=1)
    ref_sampled = jnp.transpose(
        jnp.take_along_axis(ref_n, topk[:, :, None], axis=1) * ref_w_topk[:, :, None],
        (1, 0, 2))
    assert bool(jnp.allclose(src_sampled, ref_sampled, atol=3e-2, rtol=3e-2))
    assert bool(jnp.allclose(sample_reg_loss, ref_w_topk.mean(), atol=1e-2))

    print("KERNEL_OK")
</pallas_src>

<mosaic_0001>
module attributes {stable_mosaic.version = 11 : i64} {
  func.func @_score_norm_kernel(%arg0: i32, %arg1: i32, %arg2: memref<1x32x256xf32, #tpu.memory_space<vmem>>, %arg3: memref<1x1x256xf32, #tpu.memory_space<vmem>>, %arg4: memref<32x32xf32, #tpu.memory_space<vmem>>, %arg5: memref<32x1xf32, #tpu.memory_space<vmem>>, %arg6: memref<32x1xf32, #tpu.memory_space<vmem>>, %arg7: memref<1x1xf32, #tpu.memory_space<vmem>>, %arg8: memref<1x1x256xf32, #tpu.memory_space<vmem>>, %arg9: memref<256x32xf32, #tpu.memory_space<vmem>>) attributes {dimension_semantics = [#tpu.dimension_semantics<parallel>, #tpu.dimension_semantics<parallel>], iteration_bounds = array<i64: 2, 1>, scalar_prefetch = 0 : i64, scratch_operands = 0 : i64, tpu.core_type = #tpu.core_type<tc>, window_params = [{transform_indices = @transform_0, window_bounds = array<i64: 1, 32, 256>}, {transform_indices = @transform_1, window_bounds = array<i64: 1, 1, 256>}, {pipeline_mode = #tpu.pipeline_mode<synchronous>, transform_indices = @transform_2, window_bounds = array<i64: 32, 32>}, {pipeline_mode = #tpu.pipeline_mode<synchronous>, transform_indices = @transform_3, window_bounds = array<i64: 32, 1>}, {pipeline_mode = #tpu.pipeline_mode<synchronous>, transform_indices = @transform_4, window_bounds = array<i64: 32, 1>}, {pipeline_mode = #tpu.pipeline_mode<synchronous>, transform_indices = @transform_5, window_bounds = array<i64: 1, 1>}, {transform_indices = @transform_6, window_bounds = array<i64: 1, 1, 256>}, {transform_indices = @transform_7, window_bounds = array<i64: 256, 32>}]} {
    %c0 = arith.constant 0 : index
    %c0_0 = arith.constant 0 : index
    %c0_1 = arith.constant 0 : index
    %0 = vector.load %arg2[%c0, %c0_0, %c0_1] : memref<1x32x256xf32, #tpu.memory_space<vmem>>, vector<1x32x256xf32>
    %1 = vector.shape_cast %0 : vector<1x32x256xf32> to vector<32x256xf32>
    %c0_2 = arith.constant 0 : index
    %c0_3 = arith.constant 0 : index
    %c0_4 = arith.constant 0 : index
    %2 = vector.load %arg3[%c0_2, %c0_3, %c0_4] : memref<1x1x256xf32, #tpu.memory_space<vmem>>, vector<1x1x256xf32>
    %3 = vector.shape_cast %2 : vector<1x1x256xf32> to vector<1x256xf32>
    %4 = vector.broadcast %3 : vector<1x256xf32> to vector<32x256xf32>
    %5 = arith.mulf %1, %4 : vector<32x256xf32>
    %c0_5 = arith.constant 0 : index
    %c0_6 = arith.constant 0 : index
    %6 = vector.load %arg4[%c0_5, %c0_6] : memref<32x32xf32, #tpu.memory_space<vmem>>, vector<32x32xf32>
    %cst = arith.constant dense<0.000000e+00> : vector<32x256xf32>
    %7 = tpu.matmul %6, %5, %cst {dimension_numbers = #tpu.dot_dimension_numbers<[1], [0], [0], [1], [0, 0, 1, 1], [], []>} : vector<32x32xf32>, vector<32x256xf32>, vector<32x256xf32> -> vector<32x256xf32>
    %c0_7 = arith.constant 0 : index
    %c0_8 = arith.constant 0 : index
    %8 = vector.load %arg5[%c0_7, %c0_8] : memref<32x1xf32, #tpu.memory_space<vmem>>, vector<32x1xf32>
    %9 = vector.broadcast %8 : vector<32x1xf32> to vector<32x256xf32>
    %10 = arith.addf %7, %9 : vector<32x256xf32>
    %cst_9 = arith.constant 0.000000e+00 : f32
    %11 = vector.broadcast %cst_9 : f32 to vector<32x256xf32>
    %12 = arith.maximumf %10, %11 : vector<32x256xf32>
    %c0_10 = arith.constant 0 : index
    %c0_11 = arith.constant 0 : index
    %13 = vector.load %arg6[%c0_10, %c0_11] : memref<32x1xf32, #tpu.memory_space<vmem>>, vector<32x1xf32>
    %14 = vector.broadcast %13 : vector<32x1xf32> to vector<32x256xf32>
    %15 = arith.mulf %12, %14 : vector<32x256xf32>
    %cst_12 = arith.constant dense<0.000000e+00> : vector<256xf32>
    %16 = vector.multi_reduction <add>, %15, %cst_12 [0] : vector<32x256xf32> to vector<256xf32>
    %17 = vector.shape_cast %16 : vector<256xf32> to vector<1x256xf32>
    %c0_13 = arith.constant 0 : index
    %c0_14 = arith.constant 0 : index
    %18 = vector.load %arg7[%c0_13, %c0_14] : memref<1x1xf32, #tpu.memory_space<vmem>>, vector<1x1xf32>
    %19 = vector.broadcast %18 : vector<1x1xf32> to vector<1x256xf32>
    %20 = arith.addf %17, %19 : vector<1x256xf32>
    %21 = arith.negf %20 : vector<1x256xf32>
    %22 = math.exp %21 : vector<1x256xf32>
    %cst_15 = arith.constant 1.000000e+00 : f32
    %23 = vector.broadcast %cst_15 : f32 to vector<1x256xf32>
    %24 = arith.addf %23, %22 : vector<1x256xf32>
    %25 = arith.divf %23, %24 : vector<1x256xf32>
    %c0_16 = arith.constant 0 : index
    %c0_17 = arith.constant 0 : index
    %c0_18 = arith.constant 0 : index
    %26 = vector.load %arg8[%c0_16, %c0_17, %c0_18] : memref<1x1x256xf32, #tpu.memory_space<vmem>>, vector<1x1x256xf32>
    %27 = vector.shape_cast %26 : vector<1x1x256xf32> to vector<1x256xf32>
    %28 = vector.shape_cast %25 : vector<1x256xf32> to vector<1x1x256xf32>
    tpu.vector_store %arg8[%c0_16, %c0_17, %c0_18], %28 {strides = array<i32>} : memref<1x1x256xf32, #tpu.memory_space<vmem>>, vector<1x1x256xf32>,
    %cst_19 = arith.constant dense<0.000000e+00> : vector<256xf32>
    %29 = vector.multi_reduction <add>, %1, %cst_19 [0] : vector<32x256xf32> to vector<256xf32>
    %30 = vector.shape_cast %29 : vector<256xf32> to vector<1x256xf32>
    %cst_20 = arith.constant 3.200000e+01 : f32
    %31 = vector.broadcast %cst_20 : f32 to vector<1x256xf32>
    %32 = arith.divf %30, %31 : vector<1x256xf32>
    %33 = vector.broadcast %32 : vector<1x256xf32> to vector<32x256xf32>
    %34 = arith.subf %1, %33 : vector<32x256xf32>
    %35 = arith.mulf %34, %34 : vector<32x256xf32>
    %cst_21 = arith.constant dense<0.000000e+00> : vector<256xf32>
    %36 = vector.multi_reduction <add>, %35, %cst_21 [0] : vector<32x256xf32> to vector<256xf32>
    %37 = vector.shape_cast %36 : vector<256xf32> to vector<1x256xf32>
    %cst_22 = arith.constant 3.200000e+01 : f32
    %38 = vector.broadcast %cst_22 : f32 to vector<1x256xf32>
    %39 = arith.divf %37, %38 : vector<1x256xf32>
    %40 = vector.broadcast %32 : vector<1x256xf32> to vector<32x256xf32>
    %41 = arith.subf %1, %40 : vector<32x256xf32>
    %cst_23 = arith.constant 9.99999974E-6 : f32
    %42 = vector.broadcast %cst_23 : f32 to vector<1x256xf32>
    %43 = arith.addf %39, %42 : vector<1x256xf32>
    %44 = math.rsqrt %43 : vector<1x256xf32>
    %45 = vector.broadcast %44 : vector<1x256xf32> to vector<32x256xf32>
    %46 = arith.mulf %41, %45 : vector<32x256xf32>
    %47 = tpu.transpose %46, [1, 0] : vector<32x256xf32> -> vector<256x32xf32>
    %c0_24 = arith.constant 0 : index
    %c0_25 = arith.constant 0 : index
    %48 = vector.load %arg9[%c0_24, %c0_25] : memref<256x32xf32, #tpu.memory_space<vmem>>, vector<256x32xf32>
    tpu.vector_store %arg9[%c0_24, %c0_25], %47 {strides = array<i32>} : memref<256x32xf32, #tpu.memory_space<vmem>>, vector<256x32xf32>,
    return
  }
  func.func @transform_0(%arg0: i32, %arg1: i32) -> (i32, i32, i32) {
    %c0_i32 = arith.constant 0 : i32
    %c0_i32_0 = arith.constant 0 : i32
    return %arg0, %c0_i32, %arg1 : i32, i32, i32
  }
  func.func @transform_1(%arg0: i32, %arg1: i32) -> (i32, i32, i32) {
    %c0_i32 = arith.constant 0 : i32
    %c0_i32_0 = arith.constant 0 : i32
    return %arg0, %c0_i32, %arg1 : i32, i32, i32
  }
  func.func @transform_2(%arg0: i32, %arg1: i32) -> (i32, i32) {
    %c0_i32 = arith.constant 0 : i32
    %c0_i32_0 = arith.constant 0 : i32
    %c0_i32_1 = arith.constant 0 : i32
    return %c0_i32, %c0_i32_0 : i32, i32
  }
  func.func @transform_3(%arg0: i32, %arg1: i32) -> (i32, i32) {
    %c0_i32 = arith.constant 0 : i32
    %c0_i32_0 = arith.constant 0 : i32
    %c0_i32_1 = arith.constant 0 : i32
    return %c0_i32, %c0_i32_0 : i32, i32
  }
  func.func @transform_4(%arg0: i32, %arg1: i32) -> (i32, i32) {
    %c0_i32 = arith.constant 0 : i32
    %c0_i32_0 = arith.constant 0 : i32
    %c0_i32_1 = arith.constant 0 : i32
    return %c0_i32, %c0_i32_0 : i32, i32
  }
  func.func @transform_5(%arg0: i32, %arg1: i32) -> (i32, i32) {
    %c0_i32 = arith.constant 0 : i32
    %c0_i32_0 = arith.constant 0 : i32
    %c0_i32_1 = arith.constant 0 : i32
    return %c0_i32, %c0_i32_0 : i32, i32
  }
  func.func @transform_6(%arg0: i32, %arg1: i32) -> (i32, i32, i32) {
    %c0_i32 = arith.constant 0 : i32
    %c0_i32_0 = arith.constant 0 : i32
    return %arg0, %c0_i32, %arg1 : i32, i32, i32
  }
  func.func @transform_7(%arg0: i32, %arg1: i32) -> (i32, i32) {
    %c1_i32 = arith.constant 1 : i32
    %0 = arith.muli %arg0, %c1_i32 : i32
    %1 = arith.addi %0, %arg1 : i32
    %c0_i32 = arith.constant 0 : i32
    %c0_i32_0 = arith.constant 0 : i32
    return %1, %c0_i32 : i32, i32
  }
}

</mosaic_0001>

<llo_original>
// kernel: tpu_custom_call.1
$region0: #{tpu_custom_call.1}
  #allocation0 [shape = 'u32[]', space=smem, size = 0x4, offset = 0x4, fixed_abs, tag = 'smem constant byte address 0x4 - core index']
  #allocation1 [shape = 'u32[144,128]{1,0:T(1,128)}', space=vmem, size = 0x12000, scoped, tag = 'internal scratch']
  #allocation2 [shape = 'f32[1,1]{1,0:T(1,128)S(1)}', space=vmem, size = 0x200, scoped, tag = 'scoped memory for tpu_custom_call.1']
  %s0 = inlined_call_operand.hbm [shape: f32[2,32,256], index: 0, kind: input, shape index: {}]
  %s1 = inlined_call_operand.vmem [shape: f32[2,1,256], index: 1, kind: input, shape index: {}]
  %s2 = inlined_call_operand.vmem [shape: f32[32,32], index: 2, kind: input, shape index: {}]
  %s3 = inlined_call_operand.vmem [shape: f32[32,1], index: 3, kind: input, shape index: {}]
  %s4 = inlined_call_operand.vmem [shape: f32[32,1], index: 4, kind: input, shape index: {}]
  %s5 = inlined_call_operand.<no memory space> [shape: f32[1,1], index: 5, kind: input, shape index: {}]
  %s6 = inlined_call_operand.hbm [shape: f32[2,1,256], index: 6, kind: output, shape index: {0}]
  %s7 = inlined_call_operand.vmem [shape: f32[512,32], index: 7, kind: output, shape index: {1}]
  %8 = xla_tuple %s6, %s7
  %s9 = sld [smem:[#allocation0]]
  $region69: #{tpu_custom_call.1} parent=0
    _
  %s11 = ssub.s32 1, %s9
  %s12 = scalar_select 0, %s11, %s9
  %v13 = vstv %s5
  %14 = vst [vmem:[#allocation2] sm:$0x1] %v13
  $region1: #{tpu_custom_call.1} parent=0
    #allocation3 [shape = 'u8[65536]{0}', space=vmem, size = 0x10000, scoped, tag = 'input window, operand 0']
    #allocation4 [shape = 's32[2]{0}', space=sflag, size = 0x8, scoped, tag = 'scoped memory for tpu_custom_call.1']
    #allocation5 [shape = 's32[2]{0}', space=sflag, size = 0x8, scoped, tag = 'scoped memory for tpu_custom_call.1']
    #allocation6 [shape = 'u8[2048]{0}', space=vmem, size = 0x800, scoped, tag = 'output window, operand 0']
    %15 = vsyncpa [#allocation4], 0
    %s16 = scalar_lea.sflag [#allocation4], 1
    %17 = vsyncpa %s16, 0
    %18 = vsyncpa [#allocation5], 0
    %s19 = scalar_lea.sflag [#allocation5], 1
    %20 = vsyncpa %s19, 0
    loop: start=0, step=1, limit=4
    $region2: #{tpu_custom_call.1} parent=1 // loop_pre_header
      _
    $region3: #{tpu_custom_call.1} parent=1 // loop_header
      %s22 = sphi 0, %s26
      %p23 = scmp.ge.s32.totalorder %s22, 4
      %s29 = sphi 0, %s41
      %s30 = sphi 0, %s37
      %s31 = sphi 0, %s29
      %s32 = sphi 0, %s30
      %s33 = sphi 0, %s31
      %s34 = sphi 0, %s32
      %s46 = sphi 0, %s48
      %s49 = sphi 0, %s46
      %s50 = sphi 0, %s49
      %s66 = sphi 0, %s50
      %s74 = sphi 0, %s76
      %s77 = sphi 0, %s74
      %s78 = sphi 0, %s77
      %s94 = sphi 0, %s78
      %s98 = sphi 0, %s98
      %s100 = sphi 0, %s98
      %s101 = sphi 0, %s100
      %s115 = sphi 0, %s101
      %s119 = sphi 0, %s119
      %s121 = sphi 0, %s119
      %s122 = sphi 0, %s121
      %s136 = sphi 0, %s122
      %s140 = sphi 0, %s140
      %s142 = sphi 0, %s140
      %s143 = sphi 0, %s142
      %s157 = sphi 0, %s143
      %s161 = sphi 0, %s161
      %s163 = sphi 0, %s161
      %s164 = sphi 0, %s163
      %s178 = sphi 0, %s164
      %s186 = sphi 0, %s188
      %s189 = sphi 0, %s186
      %s190 = sphi 0, %s189
      %s206 = sphi 0, %s190
      %s214 = sphi 0, %s216
      %s217 = sphi 0, %s214
      %s218 = sphi 0, %s217
      %s234 = sphi 0, %s218
    $region4: #{tpu_custom_call.1} parent=1 // loop_header_branch
      %25 = sbr.rel (%p23) target = $region8
    $region5: #{tpu_custom_call.1} parent=1 // loop_body
      %s27 = ssub.s32 %s22, 1
      %s28 = ssub.s32 %s22, 2
      %s35 = sadd.s32 1, %s30
      %p36 = scmp.ge.s32.totalorder %s35, 1
      %s37 = scalar_select %p36, 0, %s35
      %s38 = sadd.s32 1, %s29
      %s39 = scalar_select %p36, %s38, %s29
      %p40 = scmp.ge.s32.totalorder %s39, 2
      %s41 = scalar_select %p40, 0, %s39
      %s42 = ssub.s32 %s29, %s41
      %s43 = ssub.s32 %s30, %s37
      %s44 = sor.u32 %s42, %s43
      %p45 = scmp.eq.s32.totalorder %s44, 0
      %s47 = sadd.s32 %s46, 1
      %s48 = scalar_select %p45, %s46, %s47
      %p51 = pneg %p45
      %p52 = scmp.eq.s32.totalorder %s22, 1
      %p53 = por %p51, %p52
      %p54 = scmp.ne.s32.totalorder %s46, %s49
      %p55 = scmp.eq.s32.totalorder %s22, 0
      %p56 = por %p54, %p55
      %p57 = scmp.ne.s32.totalorder %s46, %s49
      %p58 = scmp.eq.s32.totalorder %s27, 1
      %p59 = por %p57, %p58
      %p60 = scmp.ne.s32.totalorder %s49, %s50
      %p61 = scmp.eq.s32.totalorder %s27, 0
      %p62 = por %p60, %p61
      %p63 = scmp.ne.s32.totalorder %s49, %s50
      %p64 = scmp.eq.s32.totalorder %s28, 1
      %p65 = por %p63, %p64
      %p67 = scmp.ne.s32.totalorder %s50, %s66
      %p68 = scmp.eq.s32.totalorder %s28, 0
      %p69 = por %p67, %p68
      %s70 = ssub.s32 %s29, %s41
      %s71 = ssub.s32 %s30, %s37
      %s72 = sor.u32 %s70, %s71
      %p73 = scmp.eq.s32.totalorder %s72, 0
      %s75 = sadd.s32 %s74, 1
      %s76 = scalar_select %p73, %s74, %s75
      %p79 = pneg %p73
      %p80 = scmp.eq.s32.totalorder %s22, 1
      %p81 = por %p79, %p80
      %p82 = scmp.ne.s32.totalorder %s74, %s77
      %p83 = scmp.eq.s32.totalorder %s22, 0
      %p84 = por %p82, %p83
      %p85 = scmp.ne.s32.totalorder %s74, %s77
      %p86 = scmp.eq.s32.totalorder %s27, 1
      %p87 = por %p85, %p86
      %p88 = scmp.ne.s32.totalorder %s77, %s78
      %p89 = scmp.eq.s32.totalorder %s27, 0
      %p90 = por %p88, %p89
      %p91 = scmp.ne.s32.totalorder %s77, %s78
      %p92 = scmp.eq.s32.totalorder %s28, 1
      %p93 = por %p91, %p92
      %p95 = scmp.ne.s32.totalorder %s78, %s94
      %p96 = scmp.eq.s32.totalorder %s28, 0
      %p97 = por %p95, %p96
      %s99 = sadd.s32 %s98, 1
      %p102 = scmp.eq.s32.totalorder %s22, 1
      %p103 = scmp.ne.s32.totalorder %s98, %s100
      %p104 = scmp.eq.s32.totalorder %s22, 0
      %p105 = por %p103, %p104
      %p106 = scmp.ne.s32.totalorder %s98, %s100
      %p107 = scmp.eq.s32.totalorder %s27, 1
      %p108 = por %p106, %p107
      %p109 = scmp.ne.s32.totalorder %s100, %s101
      %p110 = scmp.eq.s32.totalorder %s27, 0
      %p111 = por %p109, %p110
      %p112 = scmp.ne.s32.totalorder %s100, %s101
      %p113 = scmp.eq.s32.totalorder %s28, 1
      %p114 = por %p112, %p113
      %p116 = scmp.ne.s32.totalorder %s101, %s115
      %p117 = scmp.eq.s32.totalorder %s28, 0
      %p118 = por %p116, %p117
      %s120 = sadd.s32 %s119, 1
      %p123 = scmp.eq.s32.totalorder %s22, 1
      %p124 = scmp.ne.s32.totalorder %s119, %s121
      %p125 = scmp.eq.s32.totalorder %s22, 0
      %p126 = por %p124, %p125
      %p127 = scmp.ne.s32.totalorder %s119, %s121
      %p128 = scmp.eq.s32.totalorder %s27, 1
      %p129 = por %p127, %p128
      %p130 = scmp.ne.s32.totalorder %s121, %s122
      %p131 = scmp.eq.s32.totalorder %s27, 0
      %p132 = por %p130, %p131
      %p133 = scmp.ne.s32.totalorder %s121, %s122
      %p134 = scmp.eq.s32.totalorder %s28, 1
      %p135 = por %p133, %p134
      %p137 = scmp.ne.s32.totalorder %s122, %s136
      %p138 = scmp.eq.s32.totalorder %s28, 0
      %p139 = por %p137, %p138
      %s141 = sadd.s32 %s140, 1
      %p144 = scmp.eq.s32.totalorder %s22, 1
      %p145 = scmp.ne.s32.totalorder %s140, %s142
      %p146 = scmp.eq.s32.totalorder %s22, 0
      %p147 = por %p145, %p146
      %p148 = scmp.ne.s32.totalorder %s140, %s142
      %p149 = scmp.eq.s32.totalorder %s27, 1
      %p150 = por %p148, %p149
      %p151 = scmp.ne.s32.totalorder %s142, %s143
      %p152 = scmp.eq.s32.totalorder %s27, 0
      %p153 = por %p151, %p152
      %p154 = scmp.ne.s32.totalorder %s142, %s143
      %p155 = scmp.eq.s32.totalorder %s28, 1
      %p156 = por %p154, %p155
      %p158 = scmp.ne.s32.totalorder %s143, %s157
      %p159 = scmp.eq.s32.totalorder %s28, 0
      %p160 = por %p158, %p159
      %s162 = sadd.s32 %s161, 1
      %p165 = scmp.eq.s32.totalorder %s22, 1
      %p166 = scmp.ne.s32.totalorder %s161, %s163
      %p167 = scmp.eq.s32.totalorder %s22, 0
      %p168 = por %p166, %p167
      %p169 = scmp.ne.s32.totalorder %s161, %s163
      %p170 = scmp.eq.s32.totalorder %s27, 1
      %p171 = por %p169, %p170
      %p172 = scmp.ne.s32.totalorder %s163, %s164
      %p173 = scmp.eq.s32.totalorder %s27, 0
      %p174 = por %p172, %p173
      %p175 = scmp.ne.s32.totalorder %s163, %s164
      %p176 = scmp.eq.s32.totalorder %s28, 1
      %p177 = por %p175, %p176
      %p179 = scmp.ne.s32.totalorder %s164, %s178
      %p180 = scmp.eq.s32.totalorder %s28, 0
      %p181 = por %p179, %p180
      %s182 = ssub.s32 %s29, %s41
      %s183 = ssub.s32 %s30, %s37
      %s184 = sor.u32 %s182, %s183
      %p185 = scmp.eq.s32.totalorder %s184, 0
      %s187 = sadd.s32 %s186, 1
      %s188 = scalar_select %p185, %s186, %s187
      %p191 = pneg %p185
      %p192 = scmp.eq.s32.totalorder %s22, 1
      %p193 = por %p191, %p192
      %p194 = scmp.ne.s32.totalorder %s186, %s189
      %p195 = scmp.eq.s32.totalorder %s22, 0
      %p196 = por %p194, %p195
      %p197 = scmp.ne.s32.totalorder %s186, %s189
      %p198 = scmp.eq.s32.totalorder %s27, 1
      %p199 = por %p197, %p198
      %p200 = scmp.ne.s32.totalorder %s189, %s190
      %p201 = scmp.eq.s32.totalorder %s27, 0
      %p202 = por %p200, %p201
      %p203 = scmp.ne.s32.totalorder %s189, %s190
      %p204 = scmp.eq.s32.totalorder %s28, 1
      %p205 = por %p203, %p204
      %p207 = scmp.ne.s32.totalorder %s190, %s206
      %p208 = scmp.eq.s32.totalorder %s28, 0
      %p209 = por %p207, %p208
      %s210 = sadd.s32 %s29, %s30
      %s211 = sadd.s32 %s41, %s37
      %s212 = ssub.s32 %s210, %s211
      %p213 = scmp.eq.s32.totalorder %s212, 0
      %s215 = sadd.s32 %s214, 1
      %s216 = scalar_select %p213, %s214, %s215
      %p219 = pneg %p213
      %p220 = scmp.eq.s32.totalorder %s22, 1
      %p221 = por %p219, %p220
      %p222 = scmp.ne.s32.totalorder %s214, %s217
      %p223 = scmp.eq.s32.totalorder %s22, 0
      %p224 = por %p222, %p223
      %p225 = scmp.ne.s32.totalorder %s214, %s217
      %p226 = scmp.eq.s32.totalorder %s27, 1
      %p227 = por %p225, %p226
      %p228 = scmp.ne.s32.totalorder %s217, %s218
      %p229 = scmp.eq.s32.totalorder %s27, 0
      %p230 = por %p228, %p229
      %p231 = scmp.ne.s32.totalorder %s217, %s218
      %p232 = scmp.eq.s32.totalorder %s28, 1
      %p233 = por %p231, %p232
      %p235 = scmp.ne.s32.totalorder %s218, %s234
      %p236 = scmp.eq.s32.totalorder %s28, 0
      %p237 = por %p235, %p236
      %p238 = scmp.le.s32.totalorder 1, %s22
      %p239 = scmp.lt.s32.totalorder %s22, 3
      %p240 = pnand %p238, %p239
      %p241 = pneg %p240
      // Predicated region
      $region9: #{tpu_custom_call.1} parent=5 // pred_check
        _
      $region10: #{tpu_custom_call.1} parent=5 // pred_check_branch
        %243 = sbr.rel (%p240) target = $region12
      $region11: #{tpu_custom_call.1} parent=5 // pred_region
        %s244 = ssub.s32 %s22, 1
        // Predicated region
        $region13: #{tpu_custom_call.1} parent=11 // pred_check
          %p245 = pneg %p111
        $region14: #{tpu_custom_call.1} parent=11 // pred_check_branch
          %247 = sbr.rel (%p245) target = $region16
        $region15: #{tpu_custom_call.1} parent=11 // pred_region
          _
        $region16: #{tpu_custom_call.1} parent=11 // pred_fallthru
          _
        // Predicated region
        $region17: #{tpu_custom_call.1} parent=11 // pred_check
          %p248 = pneg %p132
        $region18: #{tpu_custom_call.1} parent=11 // pred_check_branch
          %250 = sbr.rel (%p248) target = $region20
        $region19: #{tpu_custom_call.1} parent=11 // pred_region
          _
        $region20: #{tpu_custom_call.1} parent=11 // pred_fallthru
          _
        // Predicated region
        $region21: #{tpu_custom_call.1} parent=11 // pred_check
          %p251 = pneg %p153
        $region22: #{tpu_custom_call.1} parent=11 // pred_check_branch
          %253 = sbr.rel (%p251) target = $region24
        $region23: #{tpu_custom_call.1} parent=11 // pred_region
          _
        $region24: #{tpu_custom_call.1} parent=11 // pred_fallthru
          _
        // Predicated region
        $region25: #{tpu_custom_call.1} parent=11 // pred_check
          %p254 = pneg %p174
        $region26: #{tpu_custom_call.1} parent=11 // pred_check_branch
          %256 = sbr.rel (%p254) target = $region28
        $region27: #{tpu_custom_call.1} parent=11 // pred_region
          _
        $region28: #{tpu_custom_call.1} parent=11 // pred_fallthru
          _
      $region12: #{tpu_custom_call.1} parent=5 // pred_fallthru
        _
      %p257 = scmp.lt.s32.totalorder %s22, 2
      // Predicated region
      $region29: #{tpu_custom_call.1} parent=5 // pred_check
        %p258 = pneg %p257
      $region30: #{tpu_custom_call.1} parent=5 // pred_check_branch
        %260 = sbr.rel (%p258) target = $region32
      $region31: #{tpu_custom_call.1} parent=5 // pred_region
        // Predicated region
        $region33: #{tpu_custom_call.1} parent=31 // pred_check
          %p261 = pneg %p56
        $region34: #{tpu_custom_call.1} parent=31 // pred_check_branch
          %263 = sbr.rel (%p261) target = $region36
        $region35: #{tpu_custom_call.1} parent=31 // pred_region
          %s264 = sand.u32 %s46, 1
          %s265 = scalar_lea.sflag [#allocation4], %s264
          %s266 = sand.u32 %s46, 1
          %s267 = smul.addr %s266, 64
          %s268 = scalar_lea.vmem [#allocation3], %s267
          %s269 = smul.u32 2, %s30
          %s271 = ssub.s32 1024, 1024
          %272 = vsyncadd %s265, %s271
          %s273 = smul.addr %s29, 8
          %s274 = sadd.s32 %s269, %s273
          %s275 = smul.addr %s274, 128
          %s276 = scalar_lea.hbm %s0, %s275
          %s277 = sshll.u32 %s268, 4
          %s278 = int_to_ptr.vmem [resolvable:$true] %s277
          %283 = dma.hbm_to_vmem [thread:$0]  %s276, 1024, %s278, %s265, 256, 256, 16
        $region36: #{tpu_custom_call.1} parent=31 // pred_fallthru
          _
        // Predicated region
        $region37: #{tpu_custom_call.1} parent=31 // pred_check
          %p284 = pneg %p84
        $region38: #{tpu_custom_call.1} parent=31 // pred_check_branch
          %286 = sbr.rel (%p284) target = $region40
        $region39: #{tpu_custom_call.1} parent=31 // pred_region
          %s287 = smul.u32 2, %s30
          %p288 = scmp.lt.s32.totalorder %s29, 1
          %s289 = scalar_select %p288, %s29, 1
          %p290 = scmp.lt.s32.totalorder %s287, 1
          %s291 = scalar_select %p290, %s287, 1
          %s292 = smul.addr %s289, 2
          %s293 = sadd.s32 %s291, %s292
          %s294 = scalar_lea.vmem %s1, %s293
          %s295 = smul.u32 2, %s30
        $region40: #{tpu_custom_call.1} parent=31 // pred_fallthru
          _
      $region32: #{tpu_custom_call.1} parent=5 // pred_fallthru
        _
      %p296 = scmp.le.s32.totalorder 1, %s22
      %p297 = scmp.lt.s32.totalorder %s22, 3
      %p298 = pnand %p296, %p297
      %p299 = pneg %p298
      // Predicated region
      $region41: #{tpu_custom_call.1} parent=5 // pred_check
        _
      $region42: #{tpu_custom_call.1} parent=5 // pred_check_branch
        %301 = sbr.rel (%p298) target = $region44
      $region43: #{tpu_custom_call.1} parent=5 // pred_region
        %s302 = ssub.s32 %s22, 1
        %s303 = sand.u32 %s49, 1
        %s304 = scalar_lea.sflag [#allocation4], %s303
        %s305 = sand.u32 %s49, 1
        %s306 = smul.addr %s305, 64
        %s307 = scalar_lea.vmem [#allocation3], %s306
        // Predicated region
        $region45: #{tpu_custom_call.1} parent=43 // pred_check
          %p308 = pneg %p62
        $region46: #{tpu_custom_call.1} parent=43 // pred_check_branch
          %310 = sbr.rel (%p308) target = $region48
        $region47: #{tpu_custom_call.1} parent=43 // pred_region
          %311 = dma.done %s304, 1024
        $region48: #{tpu_custom_call.1} parent=43 // pred_fallthru
          _
        %s312 = sand.u32 %s49, 1
        %s313 = scalar_lea.sflag [#allocation4], %s312
        %s314 = sand.u32 %s49, 1
        %s315 = smul.addr %s314, 64
        %s316 = scalar_lea.vmem [#allocation3], %s315
        %p317 = pneg %p62
        %p318 = pneg %p59
        %s319 = smul.u32 2, %s32
        %p320 = scmp.lt.s32.totalorder %s31, 1
        %s321 = scalar_select %p320, %s31, 1
        %p322 = scmp.lt.s32.totalorder %s319, 1
        %s323 = scalar_select %p322, %s319, 1
        %s324 = smul.addr %s321, 2
        %s325 = sadd.s32 %s323, %s324
        %s326 = scalar_lea.vmem %s1, %s325
        %p327 = pneg %p90
        %p328 = pneg %p87
        %p329 = pneg %p111
        %p330 = pneg %p108
        %p331 = pneg %p132
        %p332 = pneg %p129
        %p333 = pneg %p153
        %p334 = pneg %p150
        %p335 = pneg %p174
        %p336 = pneg %p171
        %p337 = pneg %p202
        %p338 = pneg %p199
        %s339 = sand.u32 %s189, 1
        %s340 = scalar_lea.sflag [#allocation5], %s339
        %s341 = sand.u32 %s189, 1
        %s342 = smul.addr %s341, 2
        %s343 = scalar_lea.vmem [#allocation6], %s342
        %p344 = pneg %p230
        %p345 = pneg %p227
        %s346 = sadd.s32 %s31, %s32
        %s347 = smul.u32 32, %s346
        %p348 = scmp.lt.s32.totalorder %s347, 63
        %s349 = scalar_select %p348, %s347, 63
        %s350 = smul.addr %s349, 8
        %s351 = scalar_lea.vmem %s7, %s350
        %s352 = smul.u32 2, %s32
        %s353 = smul.u32 2, %s32
        %p354 = scmp.lt.s32.totalorder %s31, 1
        %s355 = scalar_select %p354, %s31, 1
        %p356 = scmp.lt.s32.totalorder %s353, 1
        %s357 = scalar_select %p356, %s353, 1
        %s358 = smul.addr %s355, 2
        %s359 = sadd.s32 %s357, %s358
        %s360 = scalar_lea.vmem %s1, %s359
        %s361 = smul.u32 2, %s32
        %s362 = smul.u32 2, %s32
        %s363 = sadd.s32 %s31, %s32
        %s364 = smul.u32 32, %s363
        %p365 = scmp.lt.s32.totalorder %s364, 63
        %s366 = scalar_select %p365, %s364, 63
        %s367 = smul.addr %s366, 8
        %s368 = scalar_lea.vmem %s7, %s367
        %s369 = sadd.s32 %s31, %s32
        %s370 = smul.u32 32, %s369
        %v371 = vld [vmem:[%s307] sm:$0xff]
        %v372 = vld [vmem:[%s307 + $0x8] sm:$0xff]
        %v373 = vld [vmem:[%s307 + $0x10] sm:$0xff]
        %v374 = vld [vmem:[%s307 + $0x18] sm:$0xff]
        %v375 = vld [vmem:[%s307 + $0x20] sm:$0xff]
        %v376 = vld [vmem:[%s307 + $0x28] sm:$0xff]
        %v377 = vld [vmem:[%s307 + $0x30] sm:$0xff]
        %v378 = vld [vmem:[%s307 + $0x38] sm:$0xff]
        %v379 = vld [vmem:[%s360] sm:$0x3]
        %v381 = vlaneseq
        %v382 = vshrl.u32 %v381, 7
        %v383 = vsub.s32 0, %v382
        %v384 = vrot.slane %v379, %v383
        %v385 = vlaneseq
        %v386 = vshrl.u32 %v385, 7
        %v387 = vsub.s32 1, %v386
        %v388 = vrot.slane %v379, %v387
        %v391 = vmul.f32 %v371, %v384
        %v392 = vmul.f32 %v372, %v388
        %v393 = vmul.f32 %v373, %v384
        %v394 = vmul.f32 %v374, %v388
        %v395 = vmul.f32 %v375, %v384
        %v396 = vmul.f32 %v376, %v388
        %v397 = vmul.f32 %v377, %v384
        %v398 = vmul.f32 %v378, %v388
        %v399 = vld [vmem:[%s2] sm:$0xff]
        %v400 = vld [vmem:[%s2 + $0x8] sm:$0xff]
        %v401 = vld [vmem:[%s2 + $0x10] sm:$0xff]
        %v402 = vld [vmem:[%s2 + $0x18] sm:$0xff]
        %v403 = vld [vmem:[%s3] sm:$0xff]
        %v404 = vld [vmem:[%s3 + $0x8] sm:$0xff]
        %v405 = vld [vmem:[%s3 + $0x10] sm:$0xff]
        %v406 = vld [vmem:[%s3 + $0x18] sm:$0xff]
        %408 = vset.pattern.permute.xlu0 0
        %409 = vperm.xlu0 %408, %v403
        %v410 = vpop.permute.xlu0 %409
        %413 = vset.pattern.permute.xlu0 0
        %414 = vperm.xlu0 %413, %v404
        %v415 = vpop.permute.xlu0 %414
        %418 = vset.pattern.permute.xlu0 0
        %419 = vperm.xlu0 %418, %v405
        %v420 = vpop.permute.xlu0 %419
        %423 = vset.pattern.permute.xlu0 0
        %424 = vperm.xlu0 %423, %v406
        %v425 = vpop.permute.xlu0 %424
        %vm427 = vcmask 261120
        %v429 = vsel %vm427, %v399, 0
        %v432 = vsel %vm427, %v400, 0
        %v435 = vsel %vm427, %v401, 0
        %v438 = vsel %vm427, %v402, 0
        %440 = vmatprep.subr.mxu0 %v392
        %441 = vmatpush1.msra.mxu0 %v391
        %442 = vmatprep.subr.mxu0 %v394
        %443 = vmatpush1.msra.mxu0 %v393
        %444 = vmatprep.subr.mxu0 %v396
        %445 = vmatpush1.msra.mxu0 %v395
        %446 = vmatprep.subr.mxu0 %v398
        %447 = vmatpush1.msra.mxu0 %v397
        %448 = vmatprep.subr.mxu0 0.0
        %449 = vmatpush1.msra.mxu0 0.0
        %450 = vmatprep.subr.mxu0 0.0
        %451 = vmatpush1.msra.mxu0 0.0
        %452 = vmatprep.subr.mxu0 0.0
        %453 = vmatpush1.msra.mxu0 0.0
        %454 = vmatprep.subr.mxu0 0.0
        %455 = vmatpush1.msra.mxu0 0.0
        %456 = vmatprep.subr.mxu0 0.0
        %457 = vmatpush1.msra.mxu0 0.0
        %458 = vmatprep.subr.mxu0 0.0
        %459 = vmatpush1.msra.mxu0 0.0
        %460 = vmatprep.subr.mxu0 0.0
        %461 = vmatpush1.msra.mxu0 0.0
        %462 = vmatprep.subr.mxu0 0.0
        %463 = vmatpush1.msra.mxu0 0.0
        %464 = vmatprep.subr.mxu0 0.0
        %465 = vmatpush1.msra.mxu0 0.0
        %466 = vmatprep.subr.mxu0 0.0
        %467 = vmatpush1.msra.mxu0 0.0
        %468 = vmatprep.subr.mxu0 0.0
        %469 = vmatpush1.msra.mxu0 0.0
        %470 = vmatprep.subr.mxu0 0.0
        %471 = vmatpush1.msra.mxu0 0.0
        %472 = vmatprep.subr.mxu0 0.0
        %473 = vmatpush1.msra.mxu0 0.0
        %474 = vmatprep.subr.mxu0 0.0
        %475 = vmatpush1.msra.mxu0 0.0
        %476 = vmatprep.subr.mxu0 0.0
        %477 = vmatpush1.msra.mxu0 0.0
        %478 = vmatprep.subr.mxu0 0.0
        %479 = vmatpush1.msra.mxu0 0.0
        %480 = vmatprep.subr.mxu0 0.0
        %481 = vmatpush1.msra.mxu0 0.0
        %482 = vmatprep.subr.mxu0 0.0
        %483 = vmatpush1.msra.mxu0 0.0
        %484 = vmatprep.subr.mxu0 0.0
        %485 = vmatpush1.msra.mxu0 0.0
        %486 = vmatprep.subr.mxu0 0.0
        %487 = vmatpush1.msra.mxu0 0.0
        %488 = vmatprep.subr.mxu0 0.0
        %489 = vmatpush1.msra.mxu0 0.0
        %490 = vmatprep.subr.mxu0 0.0
        %491 = vmatpush1.msra.mxu0 0.0
        %492 = vmatprep.subr.mxu0 0.0
        %493 = vmatpush1.msra.mxu0 0.0
        %494 = vmatprep.subr.mxu0 0.0
        %495 = vmatpush1.msra.mxu0 0.0
        %496 = vmatprep.subr.mxu0 0.0
        %497 = vmatpush1.msra.mxu0 0.0
        %498 = vmatprep.subr.mxu0 0.0
        %499 = vmatpush1.msra.mxu0 0.0
        %500 = vmatprep.subr.mxu0 0.0
        %501 = vmatpush1.msra.mxu0 0.0
        %502 = vmatprep.subr.mxu0 0.0
        %503 = vmatpush1.msra.mxu0 0.0
        %504 = vmatprep.mubr.f32.mxu0 0.0
        %505 = vmatmul.mubr.f32.gmra.mrb[0].mxu0 %v429
        %v506 = vpop.f32.mrb[0].mxu0
        %v507 = vadd.f32 %v410, %v506
        %v508 = vpop.f32.mrb[0].mxu0
        %v509 = vadd.f32 %v410, %v508
        %510 = vmatprep.mubr.f32.mxu0 0.0
        %511 = vmatmul.mubr.f32.gmra.mrb[0].mxu0 %v432
        %v512 = vpop.f32.mrb[0].mxu0
        %v513 = vadd.f32 %v415, %v512
        %v514 = vpop.f32.mrb[0].mxu0
        %v515 = vadd.f32 %v415, %v514
        %516 = vmatprep.mubr.f32.mxu0 0.0
        %517 = vmatmul.mubr.f32.gmra.mrb[0].mxu0 %v435
        %v518 = vpop.f32.mrb[0].mxu0
        %v519 = vadd.f32 %v420, %v518
        %v520 = vpop.f32.mrb[0].mxu0
        %v521 = vadd.f32 %v420, %v520
        %522 = vmatprep.mubr.f32.mxu0 0.0
        %523 = vmatmul.mubr.f32.gmra.mrb[0].mxu0 %v438
        %v524 = vpop.f32.mrb[0].mxu0
        %v525 = vadd.f32 %v425, %v524
        %v526 = vpop.f32.mrb[0].mxu0
        %v527 = vadd.f32 %v425, %v526
        %528 = vdwg.mxu0
        %v529 = vmax.f32 %v507, 0.0
        %v530 = vmax.f32 %v509, 0.0
        %v531 = vmax.f32 %v513, 0.0
        %v532 = vmax.f32 %v515, 0.0
        %v533 = vmax.f32 %v519, 0.0
        %v534 = vmax.f32 %v521, 0.0
        %v535 = vmax.f32 %v525, 0.0
        %v536 = vmax.f32 %v527, 0.0
        %v537 = vld [vmem:[%s4] sm:$0xff]
        %v538 = vld [vmem:[%s4 + $0x8] sm:$0xff]
        %v539 = vld [vmem:[%s4 + $0x10] sm:$0xff]
        %v540 = vld [vmem:[%s4 + $0x18] sm:$0xff]
        %542 = vset.pattern.permute.xlu0 0
        %543 = vperm.xlu0 %542, %v537
        %v544 = vpop.permute.xlu0 %543
        %547 = vset.pattern.permute.xlu0 0
        %548 = vperm.xlu0 %547, %v538
        %v549 = vpop.permute.xlu0 %548
        %552 = vset.pattern.permute.xlu0 0
        %553 = vperm.xlu0 %552, %v539
        %v554 = vpop.permute.xlu0 %553
        %557 = vset.pattern.permute.xlu0 0
        %558 = vperm.xlu0 %557, %v540
        %v559 = vpop.permute.xlu0 %558
        %v561 = vmul.f32 %v529, %v544
        %v562 = vmul.f32 %v530, %v544
        %v563 = vmul.f32 %v531, %v549
        %v564 = vmul.f32 %v532, %v549
        %v565 = vmul.f32 %v533, %v554
        %v566 = vmul.f32 %v534, %v554
        %v567 = vmul.f32 %v535, %v559
        %v568 = vmul.f32 %v536, %v559
        %v569 = vadd.f32 %v561, %v563
        %v570 = vadd.f32 %v569, %v565
        %v571 = vadd.f32 %v570, %v567
        %v572 = vrot.slane %v571, 4
        %v573 = vadd.f32 %v571, %v572
        %v574 = vrot.slane %v573, 2
        %v575 = vadd.f32 %v573, %v574
        %v576 = vrot.slane %v575, 1
        %v577 = vadd.f32 %v575, %v576
        %v578 = vadd.f32 %v562, %v564
        %v579 = vadd.f32 %v578, %v566
        %v580 = vadd.f32 %v579, %v568
        %v581 = vrot.slane %v580, 4
        %v582 = vadd.f32 %v580, %v581
        %v583 = vrot.slane %v582, 2
        %v584 = vadd.f32 %v582, %v583
        %v585 = vrot.slane %v584, 1
        %v586 = vadd.f32 %v584, %v585
        %v587 = vld [vmem:[#allocation2] sm:$0x1]
        %589 = vset.pattern.permute.xlu0 0
        %590 = vperm.xlu0 %589, %v587
        %v591 = vpop.permute.xlu0 %590
        %v593 = vlaneseq
        %v594 = vshrl.u32 %v593, 7
        %v595 = vsub.s32 0, %v594
        %v596 = vrot.slane %v591, %v595
        %v597 = vadd.f32 %v577, %v596
        %v598 = vadd.f32 %v586, %v596
        %v599 = vxor.u32 %v597, 2147483648
        %v600 = vxor.u32 %v598, 2147483648
        %v601 = vmul.f32 %v599, 1.442695
        %v602 = vpow.pop %v601
        %v603 = vmul.f32 %v600, 1.442695
        %v604 = vpow.pop %v603
        %v605 = vadd.f32 %v602, 1.0
        %v606 = vadd.f32 %v604, 1.0
        %v607 = vrcp.pop %v605
        %v608 = vmul.f32 1.0, %v607
        %v609 = vrcp.pop %v606
        %v610 = vmul.f32 1.0, %v609
        %v613 = vcombine.low %v608, %v610
        %v615 = vunpack.c.l.s4 1966171168
        %v616 = vunpack.c.0.s8 %v615
        %v617 = vlaneseq
        %v618 = vshrl.u32 %v617, 7
        %v619 = vsub.s32 %v616, %v618
        %v620 = vrot.slane %v613, %v619
        %v622 = vunpack.c.l.s4 1966171168
        %v623 = vunpack.c.0.s8 %v622
        %v624 = vlaneseq
        %v625 = vshrl.u32 %v624, 7
        %v626 = vsub.s32 %v623, %v625
        %v627 = vrot.slane %v620, %v626
        %v629 = vlaneseq
        %vm630 = vcmp.ge.s32.totalorder %v629, 0
        %vm631 = vcmp.lt.s32.totalorder %v629, 256
        %vm632 = vmand %vm630, %vm631
        %633 = vst.msk [vmem:[%s343] sm:$0x3] %vm632, %v627
        %v634 = vadd.f32 %v371, %v373
        %v635 = vadd.f32 %v634, %v375
        %v636 = vadd.f32 %v635, %v377
        %v637 = vrot.slane %v636, 4
        %v638 = vadd.f32 %v636, %v637
        %v639 = vrot.slane %v638, 2
        %v640 = vadd.f32 %v638, %v639
        %v641 = vrot.slane %v640, 1
        %v642 = vadd.f32 %v640, %v641
        %v643 = vadd.f32 %v372, %v374
        %v644 = vadd.f32 %v643, %v376
        %v645 = vadd.f32 %v644, %v378
        %v646 = vrot.slane %v645, 4
        %v647 = vadd.f32 %v645, %v646
        %v648 = vrot.slane %v647, 2
        %v649 = vadd.f32 %v647, %v648
        %v650 = vrot.slane %v649, 1
        %v651 = vadd.f32 %v649, %v650
        %v652 = vrcp.pop 32.0
        %v653 = vmul.f32 %v642, %v652
        %v654 = vmul.f32 %v651, %v652
        %v655 = vsub.f32 %v371, %v653
        %v656 = vsub.f32 %v372, %v654
        %v657 = vsub.f32 %v373, %v653
        %v658 = vsub.f32 %v374, %v654
        %v659 = vsub.f32 %v375, %v653
        %v660 = vsub.f32 %v376, %v654
        %v661 = vsub.f32 %v377, %v653
        %v662 = vsub.f32 %v378, %v654
        %v663 = vmul.f32 %v655, %v655
        %v664 = vmul.f32 %v656, %v656
        %v665 = vmul.f32 %v657, %v657
        %v666 = vmul.f32 %v658, %v658
        %v667 = vmul.f32 %v659, %v659
        %v668 = vmul.f32 %v660, %v660
        %v669 = vmul.f32 %v661, %v661
        %v670 = vmul.f32 %v662, %v662
        %v671 = vadd.f32 %v663, %v665
        %v672 = vadd.f32 %v671, %v667
        %v673 = vadd.f32 %v672, %v669
        %v674 = vrot.slane %v673, 4
        %v675 = vadd.f32 %v673, %v674
        %v676 = vrot.slane %v675, 2
        %v677 = vadd.f32 %v675, %v676
        %v678 = vrot.slane %v677, 1
        %v679 = vadd.f32 %v677, %v678
        %v680 = vadd.f32 %v664, %v666
        %v681 = vadd.f32 %v680, %v668
        %v682 = vadd.f32 %v681, %v670
        %v683 = vrot.slane %v682, 4
        %v684 = vadd.f32 %v682, %v683
        %v685 = vrot.slane %v684, 2
        %v686 = vadd.f32 %v684, %v685
        %v687 = vrot.slane %v686, 1
        %v688 = vadd.f32 %v686, %v687
        %v689 = vmul.f32 %v679, %v652
        %v690 = vmul.f32 %v688, %v652
        %v691 = vadd.f32 %v689, 1e-05
        %v692 = vadd.f32 %v690, 1e-05
        %v693 = vrsqrt.pop %v691
        %v694 = vrsqrt.pop %v692
        %v695 = vmul.f32 %v655, %v693
        %v696 = vmul.f32 %v656, %v694
        %v697 = vmul.f32 %v657, %v693
        %v698 = vmul.f32 %v658, %v694
        %v699 = vmul.f32 %v659, %v693
        %v700 = vmul.f32 %v660, %v694
        %v701 = vmul.f32 %v661, %v693
        %v702 = vmul.f32 %v662, %v694
        %703 = vxpose.xlu0.b32.start [1/16] %v695, 128
        %704 = vxpose.xlu0.b32.cont [2/16] %v697, 128
        %705 = vxpose.xlu0.b32.cont [3/16] %v699, 128
        %706 = vxpose.xlu0.b32.cont [4/16] %v701, 128
        %707 = vxpose.xlu0.b32.cont [5/16] 0.0, 128
        %708 = vxpose.xlu0.b32.cont [6/16] 0.0, 128
        %709 = vxpose.xlu0.b32.cont [7/16] 0.0, 128
        %710 = vxpose.xlu0.b32.cont [8/16] 0.0, 128
        %711 = vxpose.xlu0.b32.cont [9/16] 0.0, 128
        %712 = vxpose.xlu0.b32.cont [10/16] 0.0, 128
        %713 = vxpose.xlu0.b32.cont [11/16] 0.0, 128
        %714 = vxpose.xlu0.b32.cont [12/16] 0.0, 128
        %715 = vxpose.xlu0.b32.cont [13/16] 0.0, 128
        %716 = vxpose.xlu0.b32.cont [14/16] 0.0, 128
        %717 = vxpose.xlu0.b32.cont [15/16] 0.0, 128
        %718 = vxpose.xlu0.b32.end [16/16] 0.0, 128
        %v719 = vpop.trf.xlu0
        %v720 = vpop.trf.xlu0
        %v721 = vpop.trf.xlu0
        %v722 = vpop.trf.xlu0
        %v723 = vpop.trf.xlu0
        %v724 = vpop.trf.xlu0
        %v725 = vpop.trf.xlu0
        %v726 = vpop.trf.xlu0
        %v727 = vpop.trf.xlu0
        %v728 = vpop.trf.xlu0
        %v729 = vpop.trf.xlu0
        %v730 = vpop.trf.xlu0
        %v731 = vpop.trf.xlu0
        %v732 = vpop.trf.xlu0
        %v733 = vpop.trf.xlu0
        %v734 = vpop.trf.xlu0
        %735 = vxpose.xlu0.b32.start [1/16] %v696, 128
        %736 = vxpose.xlu0.b32.cont [2/16] %v698, 128
        %737 = vxpose.xlu0.b32.cont [3/16] %v700, 128
        %738 = vxpose.xlu0.b32.cont [4/16] %v702, 128
        %739 = vxpose.xlu0.b32.cont [5/16] 0.0, 128
        %740 = vxpose.xlu0.b32.cont [6/16] 0.0, 128
        %741 = vxpose.xlu0.b32.cont [7/16] 0.0, 128
        %742 = vxpose.xlu0.b32.cont [8/16] 0.0, 128
        %743 = vxpose.xlu0.b32.cont [9/16] 0.0, 128
        %744 = vxpose.xlu0.b32.cont [10/16] 0.0, 128
        %745 = vxpose.xlu0.b32.cont [11/16] 0.0, 128
        %746 = vxpose.xlu0.b32.cont [12/16] 0.0, 128
        %747 = vxpose.xlu0.b32.cont [13/16] 0.0, 128
        %748 = vxpose.xlu0.b32.cont [14/16] 0.0, 128
        %749 = vxpose.xlu0.b32.cont [15/16] 0.0, 128
        %750 = vxpose.xlu0.b32.end [16/16] 0.0, 128
        %v751 = vpop.trf.xlu0
        %v752 = vpop.trf.xlu0
        %v753 = vpop.trf.xlu0
        %v754 = vpop.trf.xlu0
        %v755 = vpop.trf.xlu0
        %v756 = vpop.trf.xlu0
        %v757 = vpop.trf.xlu0
        %v758 = vpop.trf.xlu0
        %v759 = vpop.trf.xlu0
        %v760 = vpop.trf.xlu0
        %v761 = vpop.trf.xlu0
        %v762 = vpop.trf.xlu0
        %v763 = vpop.trf.xlu0
        %v764 = vpop.trf.xlu0
        %v765 = vpop.trf.xlu0
        %v766 = vpop.trf.xlu0
        %767 = vst.msk [vmem:[%s368] sm:$0xff] %vm427, %v719
        %768 = vst.msk [vmem:[%s368 + $0x8] sm:$0xff] %vm427, %v720
        %769 = vst.msk [vmem:[%s368 + $0x10] sm:$0xff] %vm427, %v721
        %770 = vst.msk [vmem:[%s368 + $0x18] sm:$0xff] %vm427, %v722
        %771 = vst.msk [vmem:[%s368 + $0x20] sm:$0xff] %vm427, %v723
        %772 = vst.msk [vmem:[%s368 + $0x28] sm:$0xff] %vm427, %v724
        %773 = vst.msk [vmem:[%s368 + $0x30] sm:$0xff] %vm427, %v725
        %774 = vst.msk [vmem:[%s368 + $0x38] sm:$0xff] %vm427, %v726
        %775 = vst.msk [vmem:[%s368 + $0x40] sm:$0xff] %vm427, %v727
        %776 = vst.msk [vmem:[%s368 + $0x48] sm:$0xff] %vm427, %v728
        %777 = vst.msk [vmem:[%s368 + $0x50] sm:$0xff] %vm427, %v729
        %778 = vst.msk [vmem:[%s368 + $0x58] sm:$0xff] %vm427, %v730
        %779 = vst.msk [vmem:[%s368 + $0x60] sm:$0xff] %vm427, %v731
        %780 = vst.msk [vmem:[%s368 + $0x68] sm:$0xff] %vm427, %v732
        %781 = vst.msk [vmem:[%s368 + $0x70] sm:$0xff] %vm427, %v733
        %782 = vst.msk [vmem:[%s368 + $0x78] sm:$0xff] %vm427, %v734
        %783 = vst.msk [vmem:[%s368 + $0x80] sm:$0xff] %vm427, %v751
        %784 = vst.msk [vmem:[%s368 + $0x88] sm:$0xff] %vm427, %v752
        %785 = vst.msk [vmem:[%s368 + $0x90] sm:$0xff] %vm427, %v753
        %786 = vst.msk [vmem:[%s368 + $0x98] sm:$0xff] %vm427, %v754
        %787 = vst.msk [vmem:[%s368 + $0xa0] sm:$0xff] %vm427, %v755
        %788 = vst.msk [vmem:[%s368 + $0xa8] sm:$0xff] %vm427, %v756
        %789 = vst.msk [vmem:[%s368 + $0xb0] sm:$0xff] %vm427, %v757
        %790 = vst.msk [vmem:[%s368 + $0xb8] sm:$0xff] %vm427, %v758
        %791 = vst.msk [vmem:[%s368 + $0xc0] sm:$0xff] %vm427, %v759
        %792 = vst.msk [vmem:[%s368 + $0xc8] sm:$0xff] %vm427, %v760
        %793 = vst.msk [vmem:[%s368 + $0xd0] sm:$0xff] %vm427, %v761
        %794 = vst.msk [vmem:[%s368 + $0xd8] sm:$0xff] %vm427, %v762
        %795 = vst.msk [vmem:[%s368 + $0xe0] sm:$0xff] %vm427, %v763
        %796 = vst.msk [vmem:[%s368 + $0xe8] sm:$0xff] %vm427, %v764
        %797 = vst.msk [vmem:[%s368 + $0xf0] sm:$0xff] %vm427, %v765
        %798 = vst.msk [vmem:[%s368 + $0xf8] sm:$0xff] %vm427, %v766
        %s799 = sand.u32 %s189, 1
        %s800 = scalar_lea.sflag [#allocation5], %s799
        %s801 = sand.u32 %s189, 1
        %s802 = smul.addr %s801, 2
        %s803 = scalar_lea.vmem [#allocation6], %s802
        %s804 = sadd.s32 %s31, %s32
        %s805 = smul.u32 32, %s804
        %p806 = scmp.lt.s32.totalorder %s805, 63
        %s807 = scalar_select %p806, %s805, 63
        %s808 = smul.addr %s807, 8
        %s809 = scalar_lea.vmem %s7, %s808
        // Predicated region
        $region49: #{tpu_custom_call.1} parent=43 // pred_check
          %p810 = pneg %p199
        $region50: #{tpu_custom_call.1} parent=43 // pred_check_branch
          %812 = sbr.rel (%p810) target = $region52
        $region51: #{tpu_custom_call.1} parent=43 // pred_region
          %s813 = smul.u32 2, %s32
          %s815 = ssub.s32 32, 32
          %816 = vsyncadd %s800, %s815
          %s817 = smul.addr %s31, 2
          %s818 = sadd.s32 %s813, %s817
          %s819 = smul.addr %s818, 16
          %s820 = scalar_lea.hbm %s6, %s819
          %s822 = sshll.u32 %s803, 4
          %s823 = int_to_ptr.vmem [resolvable:$true] %s822
          %825 = dma.vmem_to_hbm [thread:$0]  %s823, 32, %s820, %s800
        $region52: #{tpu_custom_call.1} parent=43 // pred_fallthru
          _
        // Predicated region
        $region53: #{tpu_custom_call.1} parent=43 // pred_check
          %p826 = pneg %p227
        $region54: #{tpu_custom_call.1} parent=43 // pred_check_branch
          %828 = sbr.rel (%p826) target = $region56
        $region55: #{tpu_custom_call.1} parent=43 // pred_region
          %s829 = sadd.s32 %s31, %s32
          %s830 = smul.u32 32, %s829
        $region56: #{tpu_custom_call.1} parent=43 // pred_fallthru
          _
      $region44: #{tpu_custom_call.1} parent=5 // pred_fallthru
        _
      %p831 = scmp.le.s32.totalorder 2, %s22
      // Predicated region
      $region57: #{tpu_custom_call.1} parent=5 // pred_check
        %p832 = pneg %p831
      $region58: #{tpu_custom_call.1} parent=5 // pred_check_branch
        %834 = sbr.rel (%p832) target = $region60
      $region59: #{tpu_custom_call.1} parent=5 // pred_region
        %s835 = ssub.s32 %s22, 2
        // Predicated region
        $region61: #{tpu_custom_call.1} parent=59 // pred_check
          %p836 = pneg %p205
        $region62: #{tpu_custom_call.1} parent=59 // pred_check_branch
          %838 = sbr.rel (%p836) target = $region64
        $region63: #{tpu_custom_call.1} parent=59 // pred_region
          %s839 = sand.u32 %s190, 1
          %s840 = scalar_lea.sflag [#allocation5], %s839
          %s841 = sand.u32 %s190, 1
          %s842 = smul.addr %s841, 2
          %s843 = scalar_lea.vmem [#allocation6], %s842
          %844 = dma.done %s840, 32
        $region64: #{tpu_custom_call.1} parent=59 // pred_fallthru
          _
        // Predicated region
        $region65: #{tpu_custom_call.1} parent=59 // pred_check
          %p845 = pneg %p233
        $region66: #{tpu_custom_call.1} parent=59 // pred_check_branch
          %847 = sbr.rel (%p845) target = $region68
        $region67: #{tpu_custom_call.1} parent=59 // pred_region
          %s848 = sadd.s32 %s33, %s34
          %s849 = smul.u32 32, %s848
          %p850 = scmp.lt.s32.totalorder %s849, 63
          %s851 = scalar_select %p850, %s849, 63
          %s852 = smul.addr %s851, 8
          %s853 = scalar_lea.vmem %s7, %s852
        $region68: #{tpu_custom_call.1} parent=59 // pred_fallthru
          _
      $region60: #{tpu_custom_call.1} parent=5 // pred_fallthru
        _
    $region6: #{tpu_custom_call.1} parent=1 // loop_footer
      %s26 = sadd.s32 1, %s22
    $region7: #{tpu_custom_call.1} parent=1 // loop_footer_branch
      %21 = sbr.rel target = $region3
    $region8: #{tpu_custom_call.1} parent=1 // loop_exit
      _
    %854 = vsyncpa [#allocation4], 1
    %s855 = scalar_lea.sflag [#allocation4], 1
    %856 = vsyncpa %s855, 1
    %857 = vsyncpa [#allocation5], 1
    %s858 = scalar_lea.sflag [#allocation5], 1
    %859 = vsyncpa %s858, 1

</llo_original>
